<compile_context>
chip_gen: v5e
topology: v5e:2x2
jax: 0.10.0
libtpu: 0.0.40
codegen_flags: <defaults>
</compile_context>

<pallas_src>
import jax
import jax.numpy as jnp
from jax.experimental import pallas as pl
from jax.experimental.pallas import tpu as pltpu


def contrastive_head_kernel(feat_ref, w1_ref, b1_ref, w2_ref, b2_ref,
                            h_ref, z_ref):
    # feat_ref: (TN, C, HW) — channels on sublanes, spatial on lanes.
    hw = feat_ref.shape[-1]

    # adaptive_avg_pool2d((1,1)).squeeze() == mean over the spatial (last) axis.
    # Accumulate in f32 regardless of the input/compute dtype.
    feat = feat_ref[...].astype(jnp.float32)
    h = jnp.sum(feat, axis=-1) * (1.0 / hw)                  # (TN, C) f32
    h_ref[...] = h.astype(h_ref.dtype)

    # l1: x = relu(h @ W1^T + b1)   (weights passed pre-transposed as (in, out))
    x = jnp.dot(h.astype(w1_ref.dtype), w1_ref[...],
                preferred_element_type=jnp.float32) + b1_ref[...].astype(jnp.float32)
    x = jnp.maximum(x, 0.0)

    # l2: z = x @ W2^T + b2
    z = jnp.dot(x.astype(w2_ref.dtype), w2_ref[...],
                preferred_element_type=jnp.float32) + b2_ref[...].astype(jnp.float32)
    z_ref[...] = z.astype(z_ref.dtype)


def contrastive_forward(feat_nchw, w1, b1, w2, b2, *,
                        block_n=8, compute_dtype=None, vmem_limit_bytes=None):
    """feat_nchw: (N, C, H, W) backbone feature map.
    w1: (C, C), b1: (C,), w2: (feat_dim, C), b2: (feat_dim,)  (nn.Linear layout).

    block_n: batch rows per grid step (size so 2*TN*C*HW*itemsize + weights fits
             the per-generation VMEM budget; smaller on v7x than v5e/v6e).
    compute_dtype: optionally cast feat/weights (e.g. jnp.bfloat16) to halve HBM
             traffic; accumulation stays f32.
    """
    N, C, H, W = feat_nchw.shape
    Fd = w2.shape[0]
    HW = H * W
    out_dtype = feat_nchw.dtype

    # Contiguous NCHW -> (N, C, H*W): pure reshape, no HBM transpose pass.
    feat = feat_nchw.reshape(N, C, HW)
    if compute_dtype is not None:
        feat = feat.astype(compute_dtype)
        w1 = w1.astype(compute_dtype)
        w2 = w2.astype(compute_dtype)

    # Pre-transpose linear weights to (in, out); biases as f32 (1, out) rows.
    w1_t = jnp.transpose(w1)                 # (C, C)
    w2_t = jnp.transpose(w2)                 # (C, Fd)
    b1_r = b1.astype(jnp.float32).reshape(1, C)
    b2_r = b2.astype(jnp.float32).reshape(1, Fd)

    tn = min(block_n, N)
    n_pad = (-N) % tn
    if n_pad:
        feat = jnp.pad(feat, ((0, n_pad), (0, 0), (0, 0)))
    Np = N + n_pad
    grid = (Np // tn,)

    cp_kwargs = dict(dimension_semantics=("parallel",))
    if vmem_limit_bytes is not None:
        cp_kwargs["vmem_limit_bytes"] = vmem_limit_bytes

    h, z = pl.pallas_call(
        contrastive_head_kernel,
        out_shape=(jax.ShapeDtypeStruct((Np, C), out_dtype),
                   jax.ShapeDtypeStruct((Np, Fd), out_dtype)),
        grid=grid,
        in_specs=[
            pl.BlockSpec((tn, C, HW), lambda i: (i, 0, 0)),   # feat tile per step
            pl.BlockSpec((C, C), lambda i: (0, 0)),           # W1^T (resident)
            pl.BlockSpec((1, C), lambda i: (0, 0)),           # b1
            pl.BlockSpec((C, Fd), lambda i: (0, 0)),          # W2^T (resident)
            pl.BlockSpec((1, Fd), lambda i: (0, 0)),          # b2
        ],
        out_specs=(
            pl.BlockSpec((tn, C), lambda i: (i, 0)),
            pl.BlockSpec((tn, Fd), lambda i: (i, 0)),
        ),
        compiler_params=pltpu.CompilerParams(**cp_kwargs),
    )(feat, w1_t, b1_r, w2_t, b2_r)

    if n_pad:
        h = h[:N]
        z = z[:N]
    return h, z


def _reference(feat_nchw, w1, b1, w2, b2):
    h = jnp.mean(feat_nchw.astype(jnp.float32), axis=(2, 3))  # avg_pool + squeeze
    x = jnp.maximum(
        jnp.dot(h, w1.T, precision=jax.lax.Precision.HIGHEST) + b1, 0.0)
    z = jnp.dot(x, w2.T, precision=jax.lax.Precision.HIGHEST) + b2
    return h, z


if __name__ == "__main__":
    # Small but lane-dense shapes consistent with the module:
    # batch=8, num_ftrs=128, spatial 4x4 feature map, feat_dim=128.
    N, C, H, W = 8, 128, 4, 4
    FEAT_DIM = 128

    key = jax.random.PRNGKey(0)
    k_feat, k_w1, k_b1, k_w2, k_b2 = jax.random.split(key, 5)

    # Backbone feature map (stand-in for self.features(x) output).
    feat = jax.random.normal(k_feat, (N, C, H, W), dtype=jnp.float32)

    # nn.Linear parameter shapes: weight=(out, in), bias=(out,).
    w1 = jax.random.normal(k_w1, (C, C), dtype=jnp.float32) * 0.05
    b1 = jax.random.normal(k_b1, (C,), dtype=jnp.float32) * 0.05
    w2 = jax.random.normal(k_w2, (FEAT_DIM, C), dtype=jnp.float32) * 0.05
    b2 = jax.random.normal(k_b2, (FEAT_DIM,), dtype=jnp.float32) * 0.05

    h, z = contrastive_forward(feat, w1, b1, w2, b2, block_n=8)
    jax.block_until_ready((h, z))

    h_ref, z_ref = _reference(feat, w1, b1, w2, b2)
    assert h.shape == (N, C) and z.shape == (N, FEAT_DIM)
    assert jnp.allclose(h, h_ref, atol=1e-5, rtol=1e-5)
    assert jnp.allclose(z, z_ref, atol=1e-4, rtol=1e-4)

    print("KERNEL_OK")
</pallas_src>

<mosaic_0001>
module attributes {stable_mosaic.version = 11 : i64} {
  func.func @contrastive_head_kernel(%arg0: i32, %arg1: memref<8x128x16xf32, #tpu.memory_space<vmem>>, %arg2: memref<128x128xf32, #tpu.memory_space<vmem>>, %arg3: memref<1x128xf32, #tpu.memory_space<vmem>>, %arg4: memref<128x128xf32, #tpu.memory_space<vmem>>, %arg5: memref<1x128xf32, #tpu.memory_space<vmem>>, %arg6: memref<8x128xf32, #tpu.memory_space<vmem>>, %arg7: memref<8x128xf32, #tpu.memory_space<vmem>>) attributes {dimension_semantics = [#tpu.dimension_semantics<parallel>], iteration_bounds = array<i64: 1>, scalar_prefetch = 0 : i64, scratch_operands = 0 : i64, tpu.core_type = #tpu.core_type<tc>, window_params = [{transform_indices = @transform_0, window_bounds = array<i64: 8, 128, 16>}, {pipeline_mode = #tpu.pipeline_mode<synchronous>, transform_indices = @transform_1, window_bounds = array<i64: 128, 128>}, {pipeline_mode = #tpu.pipeline_mode<synchronous>, transform_indices = @transform_2, window_bounds = array<i64: 1, 128>}, {pipeline_mode = #tpu.pipeline_mode<synchronous>, transform_indices = @transform_3, window_bounds = array<i64: 128, 128>}, {pipeline_mode = #tpu.pipeline_mode<synchronous>, transform_indices = @transform_4, window_bounds = array<i64: 1, 128>}, {transform_indices = @transform_5, window_bounds = array<i64: 8, 128>}, {transform_indices = @transform_6, window_bounds = array<i64: 8, 128>}]} {
    %c0 = arith.constant 0 : index
    %c0_0 = arith.constant 0 : index
    %c0_1 = arith.constant 0 : index
    %0 = vector.load %arg1[%c0, %c0_0, %c0_1] : memref<8x128x16xf32, #tpu.memory_space<vmem>>, vector<8x128x16xf32>
    %cst = arith.constant dense<0.000000e+00> : vector<8x128xf32>
    %1 = vector.multi_reduction <add>, %0, %cst [2] : vector<8x128x16xf32> to vector<8x128xf32>
    %cst_2 = arith.constant 6.250000e-02 : f32
    %2 = vector.broadcast %cst_2 : f32 to vector<8x128xf32>
    %3 = arith.mulf %1, %2 : vector<8x128xf32>
    %c0_3 = arith.constant 0 : index
    %c0_4 = arith.constant 0 : index
    %4 = vector.load %arg6[%c0_3, %c0_4] : memref<8x128xf32, #tpu.memory_space<vmem>>, vector<8x128xf32>
    tpu.vector_store %arg6[%c0_3, %c0_4], %3 {strides = array<i32>} : memref<8x128xf32, #tpu.memory_space<vmem>>, vector<8x128xf32>,
    %c0_5 = arith.constant 0 : index
    %c0_6 = arith.constant 0 : index
    %5 = vector.load %arg2[%c0_5, %c0_6] : memref<128x128xf32, #tpu.memory_space<vmem>>, vector<128x128xf32>
    %cst_7 = arith.constant dense<0.000000e+00> : vector<8x128xf32>
    %6 = tpu.matmul %3, %5, %cst_7 {dimension_numbers = #tpu.dot_dimension_numbers<[1], [0], [0], [1], [0, 0, 1, 1], [], []>} : vector<8x128xf32>, vector<128x128xf32>, vector<8x128xf32> -> vector<8x128xf32>
    %c0_8 = arith.constant 0 : index
    %c0_9 = arith.constant 0 : index
    %7 = vector.load %arg3[%c0_8, %c0_9] : memref<1x128xf32, #tpu.memory_space<vmem>>, vector<1x128xf32>
    %8 = vector.broadcast %7 : vector<1x128xf32> to vector<8x128xf32>
    %9 = arith.addf %6, %8 : vector<8x128xf32>
    %cst_10 = arith.constant 0.000000e+00 : f32
    %10 = vector.broadcast %cst_10 : f32 to vector<8x128xf32>
    %11 = arith.maximumf %9, %10 : vector<8x128xf32>
    %c0_11 = arith.constant 0 : index
    %c0_12 = arith.constant 0 : index
    %12 = vector.load %arg4[%c0_11, %c0_12] : memref<128x128xf32, #tpu.memory_space<vmem>>, vector<128x128xf32>
    %cst_13 = arith.constant dense<0.000000e+00> : vector<8x128xf32>
    %13 = tpu.matmul %11, %12, %cst_13 {dimension_numbers = #tpu.dot_dimension_numbers<[1], [0], [0], [1], [0, 0, 1, 1], [], []>} : vector<8x128xf32>, vector<128x128xf32>, vector<8x128xf32> -> vector<8x128xf32>
    %c0_14 = arith.constant 0 : index
    %c0_15 = arith.constant 0 : index
    %14 = vector.load %arg5[%c0_14, %c0_15] : memref<1x128xf32, #tpu.memory_space<vmem>>, vector<1x128xf32>
    %15 = vector.broadcast %14 : vector<1x128xf32> to vector<8x128xf32>
    %16 = arith.addf %13, %15 : vector<8x128xf32>
    %c0_16 = arith.constant 0 : index
    %c0_17 = arith.constant 0 : index
    %17 = vector.load %arg7[%c0_16, %c0_17] : memref<8x128xf32, #tpu.memory_space<vmem>>, vector<8x128xf32>
    tpu.vector_store %arg7[%c0_16, %c0_17], %16 {strides = array<i32>} : memref<8x128xf32, #tpu.memory_space<vmem>>, vector<8x128xf32>,
    return
  }
  func.func @transform_0(%arg0: i32) -> (i32, i32, i32) {
    %c0_i32 = arith.constant 0 : i32
    %c0_i32_0 = arith.constant 0 : i32
    %c0_i32_1 = arith.constant 0 : i32
    return %arg0, %c0_i32, %c0_i32_0 : i32, i32, i32
  }
  func.func @transform_1(%arg0: i32) -> (i32, i32) {
    %c0_i32 = arith.constant 0 : i32
    %c0_i32_0 = arith.constant 0 : i32
    %c0_i32_1 = arith.constant 0 : i32
    return %c0_i32, %c0_i32_0 : i32, i32
  }
  func.func @transform_2(%arg0: i32) -> (i32, i32) {
    %c0_i32 = arith.constant 0 : i32
    %c0_i32_0 = arith.constant 0 : i32
    %c0_i32_1 = arith.constant 0 : i32
    return %c0_i32, %c0_i32_0 : i32, i32
  }
  func.func @transform_3(%arg0: i32) -> (i32, i32) {
    %c0_i32 = arith.constant 0 : i32
    %c0_i32_0 = arith.constant 0 : i32
    %c0_i32_1 = arith.constant 0 : i32
    return %c0_i32, %c0_i32_0 : i32, i32
  }
  func.func @transform_4(%arg0: i32) -> (i32, i32) {
    %c0_i32 = arith.constant 0 : i32
    %c0_i32_0 = arith.constant 0 : i32
    %c0_i32_1 = arith.constant 0 : i32
    return %c0_i32, %c0_i32_0 : i32, i32
  }
  func.func @transform_5(%arg0: i32) -> (i32, i32) {
    %c0_i32 = arith.constant 0 : i32
    %c0_i32_0 = arith.constant 0 : i32
    return %arg0, %c0_i32 : i32, i32
  }
  func.func @transform_6(%arg0: i32) -> (i32, i32) {
    %c0_i32 = arith.constant 0 : i32
    %c0_i32_0 = arith.constant 0 : i32
    return %arg0, %c0_i32 : i32, i32
  }
}

</mosaic_0001>

<llo_original>
// kernel: tpu_custom_call.1
$region0: #{tpu_custom_call.1}
  #allocation0 [shape = 'u32[]', space=smem, size = 0x4, offset = 0x4, fixed_abs, tag = 'smem constant byte address 0x4 - core index']
  #allocation1 [shape = 'u32[72,128]{1,0:T(1,128)}', space=vmem, size = 0x9000, scoped, tag = 'internal scratch']
  %s0 = inlined_call_operand.vmem [shape: f32[8,128,16], index: 0, kind: input, shape index: {}]
  %s1 = inlined_call_operand.vmem [shape: f32[128,128], index: 1, kind: input, shape index: {}]
  %s2 = inlined_call_operand.vmem [shape: f32[1,128], index: 2, kind: input, shape index: {}]
  %s3 = inlined_call_operand.vmem [shape: f32[128,128], index: 3, kind: input, shape index: {}]
  %s4 = inlined_call_operand.vmem [shape: f32[1,128], index: 4, kind: input, shape index: {}]
  %s5 = inlined_call_operand.hbm [shape: f32[8,128], index: 5, kind: output, shape index: {0}]
  %s6 = inlined_call_operand.hbm [shape: f32[8,128], index: 6, kind: output, shape index: {1}]
  %7 = xla_tuple %s5, %s6
  %s8 = sld [smem:[#allocation0]]
  $region38: #{tpu_custom_call.1} parent=0
    _
  %s10 = ssub.s32 1, %s8
  %s11 = scalar_select 0, %s10, %s8
  $region1: #{tpu_custom_call.1} parent=0
    #allocation2 [shape = 'u8[4096]{0}', space=vmem, size = 0x1000, scoped, tag = 'output window, operand 0, single buffered']
    #allocation3 [shape = 's32[1]{0}', space=sflag, size = 0x4, scoped, tag = 'scoped memory for tpu_custom_call.1']
    #allocation4 [shape = 'u8[4096]{0}', space=vmem, size = 0x1000, scoped, tag = 'output window, operand 1, single buffered']
    #allocation5 [shape = 's32[1]{0}', space=sflag, size = 0x4, scoped, tag = 'scoped memory for tpu_custom_call.1']
    %12 = vsyncpa [#allocation3], 0
    %13 = vsyncpa [#allocation5], 0
    // Predicated region
    $region2: #{tpu_custom_call.1} parent=1 // pred_check
      _
    $region3: #{tpu_custom_call.1} parent=1 // pred_check_branch
      %15 = sbr.rel (0) target = $region5
    $region4: #{tpu_custom_call.1} parent=1 // pred_region
      _
    $region5: #{tpu_custom_call.1} parent=1 // pred_fallthru
      _
    // Predicated region
    $region6: #{tpu_custom_call.1} parent=1 // pred_check
      _
    $region7: #{tpu_custom_call.1} parent=1 // pred_check_branch
      %17 = sbr.rel (0) target = $region9
    $region8: #{tpu_custom_call.1} parent=1 // pred_region
      _
    $region9: #{tpu_custom_call.1} parent=1 // pred_fallthru
      _
    // Predicated region
    $region10: #{tpu_custom_call.1} parent=1 // pred_check
      _
    $region11: #{tpu_custom_call.1} parent=1 // pred_check_branch
      %19 = sbr.rel (0) target = $region13
    $region12: #{tpu_custom_call.1} parent=1 // pred_region
      _
    $region13: #{tpu_custom_call.1} parent=1 // pred_fallthru
      _
    // Predicated region
    $region14: #{tpu_custom_call.1} parent=1 // pred_check
      _
    $region15: #{tpu_custom_call.1} parent=1 // pred_check_branch
      %21 = sbr.rel (0) target = $region17
    $region16: #{tpu_custom_call.1} parent=1 // pred_region
      _
    $region17: #{tpu_custom_call.1} parent=1 // pred_fallthru
      _
    // Predicated region
    $region18: #{tpu_custom_call.1} parent=1 // pred_check
      _
    $region19: #{tpu_custom_call.1} parent=1 // pred_check_branch
      %23 = sbr.rel (0) target = $region21
    $region20: #{tpu_custom_call.1} parent=1 // pred_region
      _
    $region21: #{tpu_custom_call.1} parent=1 // pred_fallthru
      _
    %v24 = vld [vmem:[%s0] sm:$0xff]
    %v25 = vld [vmem:[%s0 + $0x8] sm:$0xff]
    %v26 = vld [vmem:[%s0 + $0x10] sm:$0xff]
    %v27 = vld [vmem:[%s0 + $0x18] sm:$0xff]
    %v28 = vld [vmem:[%s0 + $0x20] sm:$0xff]
    %v29 = vld [vmem:[%s0 + $0x28] sm:$0xff]
    %v30 = vld [vmem:[%s0 + $0x30] sm:$0xff]
    %v31 = vld [vmem:[%s0 + $0x38] sm:$0xff]
    %v32 = vld [vmem:[%s0 + $0x40] sm:$0xff]
    %v33 = vld [vmem:[%s0 + $0x48] sm:$0xff]
    %v34 = vld [vmem:[%s0 + $0x50] sm:$0xff]
    %v35 = vld [vmem:[%s0 + $0x58] sm:$0xff]
    %v36 = vld [vmem:[%s0 + $0x60] sm:$0xff]
    %v37 = vld [vmem:[%s0 + $0x68] sm:$0xff]
    %v38 = vld [vmem:[%s0 + $0x70] sm:$0xff]
    %v39 = vld [vmem:[%s0 + $0x78] sm:$0xff]
    %v40 = vld [vmem:[%s0 + $0x80] sm:$0xff]
    %v41 = vld [vmem:[%s0 + $0x88] sm:$0xff]
    %v42 = vld [vmem:[%s0 + $0x90] sm:$0xff]
    %v43 = vld [vmem:[%s0 + $0x98] sm:$0xff]
    %v44 = vld [vmem:[%s0 + $0xa0] sm:$0xff]
    %v45 = vld [vmem:[%s0 + $0xa8] sm:$0xff]
    %v46 = vld [vmem:[%s0 + $0xb0] sm:$0xff]
    %v47 = vld [vmem:[%s0 + $0xb8] sm:$0xff]
    %v48 = vld [vmem:[%s0 + $0xc0] sm:$0xff]
    %v49 = vld [vmem:[%s0 + $0xc8] sm:$0xff]
    %v50 = vld [vmem:[%s0 + $0xd0] sm:$0xff]
    %v51 = vld [vmem:[%s0 + $0xd8] sm:$0xff]
    %v52 = vld [vmem:[%s0 + $0xe0] sm:$0xff]
    %v53 = vld [vmem:[%s0 + $0xe8] sm:$0xff]
    %v54 = vld [vmem:[%s0 + $0xf0] sm:$0xff]
    %v55 = vld [vmem:[%s0 + $0xf8] sm:$0xff]
    %v56 = vld [vmem:[%s0 + $0x100] sm:$0xff]
    %v57 = vld [vmem:[%s0 + $0x108] sm:$0xff]
    %v58 = vld [vmem:[%s0 + $0x110] sm:$0xff]
    %v59 = vld [vmem:[%s0 + $0x118] sm:$0xff]
    %v60 = vld [vmem:[%s0 + $0x120] sm:$0xff]
    %v61 = vld [vmem:[%s0 + $0x128] sm:$0xff]
    %v62 = vld [vmem:[%s0 + $0x130] sm:$0xff]
    %v63 = vld [vmem:[%s0 + $0x138] sm:$0xff]
    %v64 = vld [vmem:[%s0 + $0x140] sm:$0xff]
    %v65 = vld [vmem:[%s0 + $0x148] sm:$0xff]
    %v66 = vld [vmem:[%s0 + $0x150] sm:$0xff]
    %v67 = vld [vmem:[%s0 + $0x158] sm:$0xff]
    %v68 = vld [vmem:[%s0 + $0x160] sm:$0xff]
    %v69 = vld [vmem:[%s0 + $0x168] sm:$0xff]
    %v70 = vld [vmem:[%s0 + $0x170] sm:$0xff]
    %v71 = vld [vmem:[%s0 + $0x178] sm:$0xff]
    %v72 = vld [vmem:[%s0 + $0x180] sm:$0xff]
    %v73 = vld [vmem:[%s0 + $0x188] sm:$0xff]
    %v74 = vld [vmem:[%s0 + $0x190] sm:$0xff]
    %v75 = vld [vmem:[%s0 + $0x198] sm:$0xff]
    %v76 = vld [vmem:[%s0 + $0x1a0] sm:$0xff]
    %v77 = vld [vmem:[%s0 + $0x1a8] sm:$0xff]
    %v78 = vld [vmem:[%s0 + $0x1b0] sm:$0xff]
    %v79 = vld [vmem:[%s0 + $0x1b8] sm:$0xff]
    %v80 = vld [vmem:[%s0 + $0x1c0] sm:$0xff]
    %v81 = vld [vmem:[%s0 + $0x1c8] sm:$0xff]
    %v82 = vld [vmem:[%s0 + $0x1d0] sm:$0xff]
    %v83 = vld [vmem:[%s0 + $0x1d8] sm:$0xff]
    %v84 = vld [vmem:[%s0 + $0x1e0] sm:$0xff]
    %v85 = vld [vmem:[%s0 + $0x1e8] sm:$0xff]
    %v86 = vld [vmem:[%s0 + $0x1f0] sm:$0xff]
    %v87 = vld [vmem:[%s0 + $0x1f8] sm:$0xff]
    %v88 = vld [vmem:[%s0 + $0x200] sm:$0xff]
    %v89 = vld [vmem:[%s0 + $0x208] sm:$0xff]
    %v90 = vld [vmem:[%s0 + $0x210] sm:$0xff]
    %v91 = vld [vmem:[%s0 + $0x218] sm:$0xff]
    %v92 = vld [vmem:[%s0 + $0x220] sm:$0xff]
    %v93 = vld [vmem:[%s0 + $0x228] sm:$0xff]
    %v94 = vld [vmem:[%s0 + $0x230] sm:$0xff]
    %v95 = vld [vmem:[%s0 + $0x238] sm:$0xff]
    %v96 = vld [vmem:[%s0 + $0x240] sm:$0xff]
    %v97 = vld [vmem:[%s0 + $0x248] sm:$0xff]
    %v98 = vld [vmem:[%s0 + $0x250] sm:$0xff]
    %v99 = vld [vmem:[%s0 + $0x258] sm:$0xff]
    %v100 = vld [vmem:[%s0 + $0x260] sm:$0xff]
    %v101 = vld [vmem:[%s0 + $0x268] sm:$0xff]
    %v102 = vld [vmem:[%s0 + $0x270] sm:$0xff]
    %v103 = vld [vmem:[%s0 + $0x278] sm:$0xff]
    %v104 = vld [vmem:[%s0 + $0x280] sm:$0xff]
    %v105 = vld [vmem:[%s0 + $0x288] sm:$0xff]
    %v106 = vld [vmem:[%s0 + $0x290] sm:$0xff]
    %v107 = vld [vmem:[%s0 + $0x298] sm:$0xff]
    %v108 = vld [vmem:[%s0 + $0x2a0] sm:$0xff]
    %v109 = vld [vmem:[%s0 + $0x2a8] sm:$0xff]
    %v110 = vld [vmem:[%s0 + $0x2b0] sm:$0xff]
    %v111 = vld [vmem:[%s0 + $0x2b8] sm:$0xff]
    %v112 = vld [vmem:[%s0 + $0x2c0] sm:$0xff]
    %v113 = vld [vmem:[%s0 + $0x2c8] sm:$0xff]
    %v114 = vld [vmem:[%s0 + $0x2d0] sm:$0xff]
    %v115 = vld [vmem:[%s0 + $0x2d8] sm:$0xff]
    %v116 = vld [vmem:[%s0 + $0x2e0] sm:$0xff]
    %v117 = vld [vmem:[%s0 + $0x2e8] sm:$0xff]
    %v118 = vld [vmem:[%s0 + $0x2f0] sm:$0xff]
    %v119 = vld [vmem:[%s0 + $0x2f8] sm:$0xff]
    %v120 = vld [vmem:[%s0 + $0x300] sm:$0xff]
    %v121 = vld [vmem:[%s0 + $0x308] sm:$0xff]
    %v122 = vld [vmem:[%s0 + $0x310] sm:$0xff]
    %v123 = vld [vmem:[%s0 + $0x318] sm:$0xff]
    %v124 = vld [vmem:[%s0 + $0x320] sm:$0xff]
    %v125 = vld [vmem:[%s0 + $0x328] sm:$0xff]
    %v126 = vld [vmem:[%s0 + $0x330] sm:$0xff]
    %v127 = vld [vmem:[%s0 + $0x338] sm:$0xff]
    %v128 = vld [vmem:[%s0 + $0x340] sm:$0xff]
    %v129 = vld [vmem:[%s0 + $0x348] sm:$0xff]
    %v130 = vld [vmem:[%s0 + $0x350] sm:$0xff]
    %v131 = vld [vmem:[%s0 + $0x358] sm:$0xff]
    %v132 = vld [vmem:[%s0 + $0x360] sm:$0xff]
    %v133 = vld [vmem:[%s0 + $0x368] sm:$0xff]
    %v134 = vld [vmem:[%s0 + $0x370] sm:$0xff]
    %v135 = vld [vmem:[%s0 + $0x378] sm:$0xff]
    %v136 = vld [vmem:[%s0 + $0x380] sm:$0xff]
    %v137 = vld [vmem:[%s0 + $0x388] sm:$0xff]
    %v138 = vld [vmem:[%s0 + $0x390] sm:$0xff]
    %v139 = vld [vmem:[%s0 + $0x398] sm:$0xff]
    %v140 = vld [vmem:[%s0 + $0x3a0] sm:$0xff]
    %v141 = vld [vmem:[%s0 + $0x3a8] sm:$0xff]
    %v142 = vld [vmem:[%s0 + $0x3b0] sm:$0xff]
    %v143 = vld [vmem:[%s0 + $0x3b8] sm:$0xff]
    %v144 = vld [vmem:[%s0 + $0x3c0] sm:$0xff]
    %v145 = vld [vmem:[%s0 + $0x3c8] sm:$0xff]
    %v146 = vld [vmem:[%s0 + $0x3d0] sm:$0xff]
    %v147 = vld [vmem:[%s0 + $0x3d8] sm:$0xff]
    %v148 = vld [vmem:[%s0 + $0x3e0] sm:$0xff]
    %v149 = vld [vmem:[%s0 + $0x3e8] sm:$0xff]
    %v150 = vld [vmem:[%s0 + $0x3f0] sm:$0xff]
    %v151 = vld [vmem:[%s0 + $0x3f8] sm:$0xff]
    %vm152 = vcmask 130048
    %v153 = vsel %vm152, %v24, 0.0
    %154 = vadd.xlane.f32.xlu0 %v153
    %v155 = vpop.xlane.xlu0 %154
    %v156 = vsel %vm152, %v25, 0.0
    %157 = vadd.xlane.f32.xlu0 %v156
    %v158 = vpop.xlane.xlu0 %157
    %v159 = vsel %vm152, %v26, 0.0
    %160 = vadd.xlane.f32.xlu0 %v159
    %v161 = vpop.xlane.xlu0 %160
    %v162 = vsel %vm152, %v27, 0.0
    %163 = vadd.xlane.f32.xlu0 %v162
    %v164 = vpop.xlane.xlu0 %163
    %v165 = vsel %vm152, %v28, 0.0
    %166 = vadd.xlane.f32.xlu0 %v165
    %v167 = vpop.xlane.xlu0 %166
    %v168 = vsel %vm152, %v29, 0.0
    %169 = vadd.xlane.f32.xlu0 %v168
    %v170 = vpop.xlane.xlu0 %169
    %v171 = vsel %vm152, %v30, 0.0
    %172 = vadd.xlane.f32.xlu0 %v171
    %v173 = vpop.xlane.xlu0 %172
    %v174 = vsel %vm152, %v31, 0.0
    %175 = vadd.xlane.f32.xlu0 %v174
    %v176 = vpop.xlane.xlu0 %175
    %v177 = vsel %vm152, %v32, 0.0
    %178 = vadd.xlane.f32.xlu0 %v177
    %v179 = vpop.xlane.xlu0 %178
    %v180 = vsel %vm152, %v33, 0.0
    %181 = vadd.xlane.f32.xlu0 %v180
    %v182 = vpop.xlane.xlu0 %181
    %v183 = vsel %vm152, %v34, 0.0
    %184 = vadd.xlane.f32.xlu0 %v183
    %v185 = vpop.xlane.xlu0 %184
    %v186 = vsel %vm152, %v35, 0.0
    %187 = vadd.xlane.f32.xlu0 %v186
    %v188 = vpop.xlane.xlu0 %187
    %v189 = vsel %vm152, %v36, 0.0
    %190 = vadd.xlane.f32.xlu0 %v189
    %v191 = vpop.xlane.xlu0 %190
    %v192 = vsel %vm152, %v37, 0.0
    %193 = vadd.xlane.f32.xlu0 %v192
    %v194 = vpop.xlane.xlu0 %193
    %v195 = vsel %vm152, %v38, 0.0
    %196 = vadd.xlane.f32.xlu0 %v195
    %v197 = vpop.xlane.xlu0 %196
    %v198 = vsel %vm152, %v39, 0.0
    %199 = vadd.xlane.f32.xlu0 %v198
    %v200 = vpop.xlane.xlu0 %199
    %v201 = vsel %vm152, %v40, 0.0
    %202 = vadd.xlane.f32.xlu0 %v201
    %v203 = vpop.xlane.xlu0 %202
    %v204 = vsel %vm152, %v41, 0.0
    %205 = vadd.xlane.f32.xlu0 %v204
    %v206 = vpop.xlane.xlu0 %205
    %v207 = vsel %vm152, %v42, 0.0
    %208 = vadd.xlane.f32.xlu0 %v207
    %v209 = vpop.xlane.xlu0 %208
    %v210 = vsel %vm152, %v43, 0.0
    %211 = vadd.xlane.f32.xlu0 %v210
    %v212 = vpop.xlane.xlu0 %211
    %v213 = vsel %vm152, %v44, 0.0
    %214 = vadd.xlane.f32.xlu0 %v213
    %v215 = vpop.xlane.xlu0 %214
    %v216 = vsel %vm152, %v45, 0.0
    %217 = vadd.xlane.f32.xlu0 %v216
    %v218 = vpop.xlane.xlu0 %217
    %v219 = vsel %vm152, %v46, 0.0
    %220 = vadd.xlane.f32.xlu0 %v219
    %v221 = vpop.xlane.xlu0 %220
    %v222 = vsel %vm152, %v47, 0.0
    %223 = vadd.xlane.f32.xlu0 %v222
    %v224 = vpop.xlane.xlu0 %223
    %v225 = vsel %vm152, %v48, 0.0
    %226 = vadd.xlane.f32.xlu0 %v225
    %v227 = vpop.xlane.xlu0 %226
    %v228 = vsel %vm152, %v49, 0.0
    %229 = vadd.xlane.f32.xlu0 %v228
    %v230 = vpop.xlane.xlu0 %229
    %v231 = vsel %vm152, %v50, 0.0
    %232 = vadd.xlane.f32.xlu0 %v231
    %v233 = vpop.xlane.xlu0 %232
    %v234 = vsel %vm152, %v51, 0.0
    %235 = vadd.xlane.f32.xlu0 %v234
    %v236 = vpop.xlane.xlu0 %235
    %v237 = vsel %vm152, %v52, 0.0
    %238 = vadd.xlane.f32.xlu0 %v237
    %v239 = vpop.xlane.xlu0 %238
    %v240 = vsel %vm152, %v53, 0.0
    %241 = vadd.xlane.f32.xlu0 %v240
    %v242 = vpop.xlane.xlu0 %241
    %v243 = vsel %vm152, %v54, 0.0
    %244 = vadd.xlane.f32.xlu0 %v243
    %v245 = vpop.xlane.xlu0 %244
    %v246 = vsel %vm152, %v55, 0.0
    %247 = vadd.xlane.f32.xlu0 %v246
    %v248 = vpop.xlane.xlu0 %247
    %v249 = vsel %vm152, %v56, 0.0
    %250 = vadd.xlane.f32.xlu0 %v249
    %v251 = vpop.xlane.xlu0 %250
    %v252 = vsel %vm152, %v57, 0.0
    %253 = vadd.xlane.f32.xlu0 %v252
    %v254 = vpop.xlane.xlu0 %253
    %v255 = vsel %vm152, %v58, 0.0
    %256 = vadd.xlane.f32.xlu0 %v255
    %v257 = vpop.xlane.xlu0 %256
    %v258 = vsel %vm152, %v59, 0.0
    %259 = vadd.xlane.f32.xlu0 %v258
    %v260 = vpop.xlane.xlu0 %259
    %v261 = vsel %vm152, %v60, 0.0
    %262 = vadd.xlane.f32.xlu0 %v261
    %v263 = vpop.xlane.xlu0 %262
    %v264 = vsel %vm152, %v61, 0.0
    %265 = vadd.xlane.f32.xlu0 %v264
    %v266 = vpop.xlane.xlu0 %265
    %v267 = vsel %vm152, %v62, 0.0
    %268 = vadd.xlane.f32.xlu0 %v267
    %v269 = vpop.xlane.xlu0 %268
    %v270 = vsel %vm152, %v63, 0.0
    %271 = vadd.xlane.f32.xlu0 %v270
    %v272 = vpop.xlane.xlu0 %271
    %v273 = vsel %vm152, %v64, 0.0
    %274 = vadd.xlane.f32.xlu0 %v273
    %v275 = vpop.xlane.xlu0 %274
    %v276 = vsel %vm152, %v65, 0.0
    %277 = vadd.xlane.f32.xlu0 %v276
    %v278 = vpop.xlane.xlu0 %277
    %v279 = vsel %vm152, %v66, 0.0
    %280 = vadd.xlane.f32.xlu0 %v279
    %v281 = vpop.xlane.xlu0 %280
    %v282 = vsel %vm152, %v67, 0.0
    %283 = vadd.xlane.f32.xlu0 %v282
    %v284 = vpop.xlane.xlu0 %283
    %v285 = vsel %vm152, %v68, 0.0
    %286 = vadd.xlane.f32.xlu0 %v285
    %v287 = vpop.xlane.xlu0 %286
    %v288 = vsel %vm152, %v69, 0.0
    %289 = vadd.xlane.f32.xlu0 %v288
    %v290 = vpop.xlane.xlu0 %289
    %v291 = vsel %vm152, %v70, 0.0
    %292 = vadd.xlane.f32.xlu0 %v291
    %v293 = vpop.xlane.xlu0 %292
    %v294 = vsel %vm152, %v71, 0.0
    %295 = vadd.xlane.f32.xlu0 %v294
    %v296 = vpop.xlane.xlu0 %295
    %v297 = vsel %vm152, %v72, 0.0
    %298 = vadd.xlane.f32.xlu0 %v297
    %v299 = vpop.xlane.xlu0 %298
    %v300 = vsel %vm152, %v73, 0.0
    %301 = vadd.xlane.f32.xlu0 %v300
    %v302 = vpop.xlane.xlu0 %301
    %v303 = vsel %vm152, %v74, 0.0
    %304 = vadd.xlane.f32.xlu0 %v303
    %v305 = vpop.xlane.xlu0 %304
    %v306 = vsel %vm152, %v75, 0.0
    %307 = vadd.xlane.f32.xlu0 %v306
    %v308 = vpop.xlane.xlu0 %307
    %v309 = vsel %vm152, %v76, 0.0
    %310 = vadd.xlane.f32.xlu0 %v309
    %v311 = vpop.xlane.xlu0 %310
    %v312 = vsel %vm152, %v77, 0.0
    %313 = vadd.xlane.f32.xlu0 %v312
    %v314 = vpop.xlane.xlu0 %313
    %v315 = vsel %vm152, %v78, 0.0
    %316 = vadd.xlane.f32.xlu0 %v315
    %v317 = vpop.xlane.xlu0 %316
    %v318 = vsel %vm152, %v79, 0.0
    %319 = vadd.xlane.f32.xlu0 %v318
    %v320 = vpop.xlane.xlu0 %319
    %v321 = vsel %vm152, %v80, 0.0
    %322 = vadd.xlane.f32.xlu0 %v321
    %v323 = vpop.xlane.xlu0 %322
    %v324 = vsel %vm152, %v81, 0.0
    %325 = vadd.xlane.f32.xlu0 %v324
    %v326 = vpop.xlane.xlu0 %325
    %v327 = vsel %vm152, %v82, 0.0
    %328 = vadd.xlane.f32.xlu0 %v327
    %v329 = vpop.xlane.xlu0 %328
    %v330 = vsel %vm152, %v83, 0.0
    %331 = vadd.xlane.f32.xlu0 %v330
    %v332 = vpop.xlane.xlu0 %331
    %v333 = vsel %vm152, %v84, 0.0
    %334 = vadd.xlane.f32.xlu0 %v333
    %v335 = vpop.xlane.xlu0 %334
    %v336 = vsel %vm152, %v85, 0.0
    %337 = vadd.xlane.f32.xlu0 %v336
    %v338 = vpop.xlane.xlu0 %337
    %v339 = vsel %vm152, %v86, 0.0
    %340 = vadd.xlane.f32.xlu0 %v339
    %v341 = vpop.xlane.xlu0 %340
    %v342 = vsel %vm152, %v87, 0.0
    %343 = vadd.xlane.f32.xlu0 %v342
    %v344 = vpop.xlane.xlu0 %343
    %v345 = vsel %vm152, %v88, 0.0
    %346 = vadd.xlane.f32.xlu0 %v345
    %v347 = vpop.xlane.xlu0 %346
    %v348 = vsel %vm152, %v89, 0.0
    %349 = vadd.xlane.f32.xlu0 %v348
    %v350 = vpop.xlane.xlu0 %349
    %v351 = vsel %vm152, %v90, 0.0
    %352 = vadd.xlane.f32.xlu0 %v351
    %v353 = vpop.xlane.xlu0 %352
    %v354 = vsel %vm152, %v91, 0.0
    %355 = vadd.xlane.f32.xlu0 %v354
    %v356 = vpop.xlane.xlu0 %355
    %v357 = vsel %vm152, %v92, 0.0
    %358 = vadd.xlane.f32.xlu0 %v357
    %v359 = vpop.xlane.xlu0 %358
    %v360 = vsel %vm152, %v93, 0.0
    %361 = vadd.xlane.f32.xlu0 %v360
    %v362 = vpop.xlane.xlu0 %361
    %v363 = vsel %vm152, %v94, 0.0
    %364 = vadd.xlane.f32.xlu0 %v363
    %v365 = vpop.xlane.xlu0 %364
    %v366 = vsel %vm152, %v95, 0.0
    %367 = vadd.xlane.f32.xlu0 %v366
    %v368 = vpop.xlane.xlu0 %367
    %v369 = vsel %vm152, %v96, 0.0
    %370 = vadd.xlane.f32.xlu0 %v369
    %v371 = vpop.xlane.xlu0 %370
    %v372 = vsel %vm152, %v97, 0.0
    %373 = vadd.xlane.f32.xlu0 %v372
    %v374 = vpop.xlane.xlu0 %373
    %v375 = vsel %vm152, %v98, 0.0
    %376 = vadd.xlane.f32.xlu0 %v375
    %v377 = vpop.xlane.xlu0 %376
    %v378 = vsel %vm152, %v99, 0.0
    %379 = vadd.xlane.f32.xlu0 %v378
    %v380 = vpop.xlane.xlu0 %379
    %v381 = vsel %vm152, %v100, 0.0
    %382 = vadd.xlane.f32.xlu0 %v381
    %v383 = vpop.xlane.xlu0 %382
    %v384 = vsel %vm152, %v101, 0.0
    %385 = vadd.xlane.f32.xlu0 %v384
    %v386 = vpop.xlane.xlu0 %385
    %v387 = vsel %vm152, %v102, 0.0
    %388 = vadd.xlane.f32.xlu0 %v387
    %v389 = vpop.xlane.xlu0 %388
    %v390 = vsel %vm152, %v103, 0.0
    %391 = vadd.xlane.f32.xlu0 %v390
    %v392 = vpop.xlane.xlu0 %391
    %v393 = vsel %vm152, %v104, 0.0
    %394 = vadd.xlane.f32.xlu0 %v393
    %v395 = vpop.xlane.xlu0 %394
    %v396 = vsel %vm152, %v105, 0.0
    %397 = vadd.xlane.f32.xlu0 %v396
    %v398 = vpop.xlane.xlu0 %397
    %v399 = vsel %vm152, %v106, 0.0
    %400 = vadd.xlane.f32.xlu0 %v399
    %v401 = vpop.xlane.xlu0 %400
    %v402 = vsel %vm152, %v107, 0.0
    %403 = vadd.xlane.f32.xlu0 %v402
    %v404 = vpop.xlane.xlu0 %403
    %v405 = vsel %vm152, %v108, 0.0
    %406 = vadd.xlane.f32.xlu0 %v405
    %v407 = vpop.xlane.xlu0 %406
    %v408 = vsel %vm152, %v109, 0.0
    %409 = vadd.xlane.f32.xlu0 %v408
    %v410 = vpop.xlane.xlu0 %409
    %v411 = vsel %vm152, %v110, 0.0
    %412 = vadd.xlane.f32.xlu0 %v411
    %v413 = vpop.xlane.xlu0 %412
    %v414 = vsel %vm152, %v111, 0.0
    %415 = vadd.xlane.f32.xlu0 %v414
    %v416 = vpop.xlane.xlu0 %415
    %v417 = vsel %vm152, %v112, 0.0
    %418 = vadd.xlane.f32.xlu0 %v417
    %v419 = vpop.xlane.xlu0 %418
    %v420 = vsel %vm152, %v113, 0.0
    %421 = vadd.xlane.f32.xlu0 %v420
    %v422 = vpop.xlane.xlu0 %421
    %v423 = vsel %vm152, %v114, 0.0
    %424 = vadd.xlane.f32.xlu0 %v423
    %v425 = vpop.xlane.xlu0 %424
    %v426 = vsel %vm152, %v115, 0.0
    %427 = vadd.xlane.f32.xlu0 %v426
    %v428 = vpop.xlane.xlu0 %427
    %v429 = vsel %vm152, %v116, 0.0
    %430 = vadd.xlane.f32.xlu0 %v429
    %v431 = vpop.xlane.xlu0 %430
    %v432 = vsel %vm152, %v117, 0.0
    %433 = vadd.xlane.f32.xlu0 %v432
    %v434 = vpop.xlane.xlu0 %433
    %v435 = vsel %vm152, %v118, 0.0
    %436 = vadd.xlane.f32.xlu0 %v435
    %v437 = vpop.xlane.xlu0 %436
    %v438 = vsel %vm152, %v119, 0.0
    %439 = vadd.xlane.f32.xlu0 %v438
    %v440 = vpop.xlane.xlu0 %439
    %v441 = vsel %vm152, %v120, 0.0
    %442 = vadd.xlane.f32.xlu0 %v441
    %v443 = vpop.xlane.xlu0 %442
    %v444 = vsel %vm152, %v121, 0.0
    %445 = vadd.xlane.f32.xlu0 %v444
    %v446 = vpop.xlane.xlu0 %445
    %v447 = vsel %vm152, %v122, 0.0
    %448 = vadd.xlane.f32.xlu0 %v447
    %v449 = vpop.xlane.xlu0 %448
    %v450 = vsel %vm152, %v123, 0.0
    %451 = vadd.xlane.f32.xlu0 %v450
    %v452 = vpop.xlane.xlu0 %451
    %v453 = vsel %vm152, %v124, 0.0
    %454 = vadd.xlane.f32.xlu0 %v453
    %v455 = vpop.xlane.xlu0 %454
    %v456 = vsel %vm152, %v125, 0.0
    %457 = vadd.xlane.f32.xlu0 %v456
    %v458 = vpop.xlane.xlu0 %457
    %v459 = vsel %vm152, %v126, 0.0
    %460 = vadd.xlane.f32.xlu0 %v459
    %v461 = vpop.xlane.xlu0 %460
    %v462 = vsel %vm152, %v127, 0.0
    %463 = vadd.xlane.f32.xlu0 %v462
    %v464 = vpop.xlane.xlu0 %463
    %v465 = vsel %vm152, %v128, 0.0
    %466 = vadd.xlane.f32.xlu0 %v465
    %v467 = vpop.xlane.xlu0 %466
    %v468 = vsel %vm152, %v129, 0.0
    %469 = vadd.xlane.f32.xlu0 %v468
    %v470 = vpop.xlane.xlu0 %469
    %v471 = vsel %vm152, %v130, 0.0
    %472 = vadd.xlane.f32.xlu0 %v471
    %v473 = vpop.xlane.xlu0 %472
    %v474 = vsel %vm152, %v131, 0.0
    %475 = vadd.xlane.f32.xlu0 %v474
    %v476 = vpop.xlane.xlu0 %475
    %v477 = vsel %vm152, %v132, 0.0
    %478 = vadd.xlane.f32.xlu0 %v477
    %v479 = vpop.xlane.xlu0 %478
    %v480 = vsel %vm152, %v133, 0.0
    %481 = vadd.xlane.f32.xlu0 %v480
    %v482 = vpop.xlane.xlu0 %481
    %v483 = vsel %vm152, %v134, 0.0
    %484 = vadd.xlane.f32.xlu0 %v483
    %v485 = vpop.xlane.xlu0 %484
    %v486 = vsel %vm152, %v135, 0.0
    %487 = vadd.xlane.f32.xlu0 %v486
    %v488 = vpop.xlane.xlu0 %487
    %v489 = vsel %vm152, %v136, 0.0
    %490 = vadd.xlane.f32.xlu0 %v489
    %v491 = vpop.xlane.xlu0 %490
    %v492 = vsel %vm152, %v137, 0.0
    %493 = vadd.xlane.f32.xlu0 %v492
    %v494 = vpop.xlane.xlu0 %493
    %v495 = vsel %vm152, %v138, 0.0
    %496 = vadd.xlane.f32.xlu0 %v495
    %v497 = vpop.xlane.xlu0 %496
    %v498 = vsel %vm152, %v139, 0.0
    %499 = vadd.xlane.f32.xlu0 %v498
    %v500 = vpop.xlane.xlu0 %499
    %v501 = vsel %vm152, %v140, 0.0
    %502 = vadd.xlane.f32.xlu0 %v501
    %v503 = vpop.xlane.xlu0 %502
    %v504 = vsel %vm152, %v141, 0.0
    %505 = vadd.xlane.f32.xlu0 %v504
    %v506 = vpop.xlane.xlu0 %505
    %v507 = vsel %vm152, %v142, 0.0
    %508 = vadd.xlane.f32.xlu0 %v507
    %v509 = vpop.xlane.xlu0 %508
    %v510 = vsel %vm152, %v143, 0.0
    %511 = vadd.xlane.f32.xlu0 %v510
    %v512 = vpop.xlane.xlu0 %511
    %v513 = vsel %vm152, %v144, 0.0
    %514 = vadd.xlane.f32.xlu0 %v513
    %v515 = vpop.xlane.xlu0 %514
    %v516 = vsel %vm152, %v145, 0.0
    %517 = vadd.xlane.f32.xlu0 %v516
    %v518 = vpop.xlane.xlu0 %517
    %v519 = vsel %vm152, %v146, 0.0
    %520 = vadd.xlane.f32.xlu0 %v519
    %v521 = vpop.xlane.xlu0 %520
    %v522 = vsel %vm152, %v147, 0.0
    %523 = vadd.xlane.f32.xlu0 %v522
    %v524 = vpop.xlane.xlu0 %523
    %v525 = vsel %vm152, %v148, 0.0
    %526 = vadd.xlane.f32.xlu0 %v525
    %v527 = vpop.xlane.xlu0 %526
    %v528 = vsel %vm152, %v149, 0.0
    %529 = vadd.xlane.f32.xlu0 %v528
    %v530 = vpop.xlane.xlu0 %529
    %v531 = vsel %vm152, %v150, 0.0
    %532 = vadd.xlane.f32.xlu0 %v531
    %v533 = vpop.xlane.xlu0 %532
    %v534 = vsel %vm152, %v151, 0.0
    %535 = vadd.xlane.f32.xlu0 %v534
    %v536 = vpop.xlane.xlu0 %535
    %v537 = vmul.f32 %v155, 0.0625
    %v538 = vmul.f32 %v158, 0.0625
    %v539 = vmul.f32 %v161, 0.0625
    %v540 = vmul.f32 %v164, 0.0625
    %v541 = vmul.f32 %v167, 0.0625
    %v542 = vmul.f32 %v170, 0.0625
    %v543 = vmul.f32 %v173, 0.0625
    %v544 = vmul.f32 %v176, 0.0625
    %v545 = vmul.f32 %v179, 0.0625
    %v546 = vmul.f32 %v182, 0.0625
    %v547 = vmul.f32 %v185, 0.0625
    %v548 = vmul.f32 %v188, 0.0625
    %v549 = vmul.f32 %v191, 0.0625
    %v550 = vmul.f32 %v194, 0.0625
    %v551 = vmul.f32 %v197, 0.0625
    %v552 = vmul.f32 %v200, 0.0625
    %v553 = vmul.f32 %v203, 0.0625
    %v554 = vmul.f32 %v206, 0.0625
    %v555 = vmul.f32 %v209, 0.0625
    %v556 = vmul.f32 %v212, 0.0625
    %v557 = vmul.f32 %v215, 0.0625
    %v558 = vmul.f32 %v218, 0.0625
    %v559 = vmul.f32 %v221, 0.0625
    %v560 = vmul.f32 %v224, 0.0625
    %v561 = vmul.f32 %v227, 0.0625
    %v562 = vmul.f32 %v230, 0.0625
    %v563 = vmul.f32 %v233, 0.0625
    %v564 = vmul.f32 %v236, 0.0625
    %v565 = vmul.f32 %v239, 0.0625
    %v566 = vmul.f32 %v242, 0.0625
    %v567 = vmul.f32 %v245, 0.0625
    %v568 = vmul.f32 %v248, 0.0625
    %v569 = vmul.f32 %v251, 0.0625
    %v570 = vmul.f32 %v254, 0.0625
    %v571 = vmul.f32 %v257, 0.0625
    %v572 = vmul.f32 %v260, 0.0625
    %v573 = vmul.f32 %v263, 0.0625
    %v574 = vmul.f32 %v266, 0.0625
    %v575 = vmul.f32 %v269, 0.0625
    %v576 = vmul.f32 %v272, 0.0625
    %v577 = vmul.f32 %v275, 0.0625
    %v578 = vmul.f32 %v278, 0.0625
    %v579 = vmul.f32 %v281, 0.0625
    %v580 = vmul.f32 %v284, 0.0625
    %v581 = vmul.f32 %v287, 0.0625
    %v582 = vmul.f32 %v290, 0.0625
    %v583 = vmul.f32 %v293, 0.0625
    %v584 = vmul.f32 %v296, 0.0625
    %v585 = vmul.f32 %v299, 0.0625
    %v586 = vmul.f32 %v302, 0.0625
    %v587 = vmul.f32 %v305, 0.0625
    %v588 = vmul.f32 %v308, 0.0625
    %v589 = vmul.f32 %v311, 0.0625
    %v590 = vmul.f32 %v314, 0.0625
    %v591 = vmul.f32 %v317, 0.0625
    %v592 = vmul.f32 %v320, 0.0625
    %v593 = vmul.f32 %v323, 0.0625
    %v594 = vmul.f32 %v326, 0.0625
    %v595 = vmul.f32 %v329, 0.0625
    %v596 = vmul.f32 %v332, 0.0625
    %v597 = vmul.f32 %v335, 0.0625
    %v598 = vmul.f32 %v338, 0.0625
    %v599 = vmul.f32 %v341, 0.0625
    %v600 = vmul.f32 %v344, 0.0625
    %v601 = vmul.f32 %v347, 0.0625
    %v602 = vmul.f32 %v350, 0.0625
    %v603 = vmul.f32 %v353, 0.0625
    %v604 = vmul.f32 %v356, 0.0625
    %v605 = vmul.f32 %v359, 0.0625
    %v606 = vmul.f32 %v362, 0.0625
    %v607 = vmul.f32 %v365, 0.0625
    %v608 = vmul.f32 %v368, 0.0625
    %v609 = vmul.f32 %v371, 0.0625
    %v610 = vmul.f32 %v374, 0.0625
    %v611 = vmul.f32 %v377, 0.0625
    %v612 = vmul.f32 %v380, 0.0625
    %v613 = vmul.f32 %v383, 0.0625
    %v614 = vmul.f32 %v386, 0.0625
    %v615 = vmul.f32 %v389, 0.0625
    %v616 = vmul.f32 %v392, 0.0625
    %v617 = vmul.f32 %v395, 0.0625
    %v618 = vmul.f32 %v398, 0.0625
    %v619 = vmul.f32 %v401, 0.0625
    %v620 = vmul.f32 %v404, 0.0625
    %v621 = vmul.f32 %v407, 0.0625
    %v622 = vmul.f32 %v410, 0.0625
    %v623 = vmul.f32 %v413, 0.0625
    %v624 = vmul.f32 %v416, 0.0625
    %v625 = vmul.f32 %v419, 0.0625
    %v626 = vmul.f32 %v422, 0.0625
    %v627 = vmul.f32 %v425, 0.0625
    %v628 = vmul.f32 %v428, 0.0625
    %v629 = vmul.f32 %v431, 0.0625
    %v630 = vmul.f32 %v434, 0.0625
    %v631 = vmul.f32 %v437, 0.0625
    %v632 = vmul.f32 %v440, 0.0625
    %v633 = vmul.f32 %v443, 0.0625
    %v634 = vmul.f32 %v446, 0.0625
    %v635 = vmul.f32 %v449, 0.0625
    %v636 = vmul.f32 %v452, 0.0625
    %v637 = vmul.f32 %v455, 0.0625
    %v638 = vmul.f32 %v458, 0.0625
    %v639 = vmul.f32 %v461, 0.0625
    %v640 = vmul.f32 %v464, 0.0625
    %v641 = vmul.f32 %v467, 0.0625
    %v642 = vmul.f32 %v470, 0.0625
    %v643 = vmul.f32 %v473, 0.0625
    %v644 = vmul.f32 %v476, 0.0625
    %v645 = vmul.f32 %v479, 0.0625
    %v646 = vmul.f32 %v482, 0.0625
    %v647 = vmul.f32 %v485, 0.0625
    %v648 = vmul.f32 %v488, 0.0625
    %v649 = vmul.f32 %v491, 0.0625
    %v650 = vmul.f32 %v494, 0.0625
    %v651 = vmul.f32 %v497, 0.0625
    %v652 = vmul.f32 %v500, 0.0625
    %v653 = vmul.f32 %v503, 0.0625
    %v654 = vmul.f32 %v506, 0.0625
    %v655 = vmul.f32 %v509, 0.0625
    %v656 = vmul.f32 %v512, 0.0625
    %v657 = vmul.f32 %v515, 0.0625
    %v658 = vmul.f32 %v518, 0.0625
    %v659 = vmul.f32 %v521, 0.0625
    %v660 = vmul.f32 %v524, 0.0625
    %v661 = vmul.f32 %v527, 0.0625
    %v662 = vmul.f32 %v530, 0.0625
    %v663 = vmul.f32 %v533, 0.0625
    %v664 = vmul.f32 %v536, 0.0625
    %v793 = vlaneseq
    %v794 = vand.u32 %v793, 127
    %v795 = vperm.slane %v537, %v794
    %v796 = vadd.s32 %v794, 4294967288
    %v797 = vperm.slane %v538, %v796
    %vm798 = vcmask 130112
    %v799 = vsel %vm798, %v797, %v795
    %v800 = vadd.s32 %v794, 4294967280
    %v801 = vperm.slane %v539, %v800
    %vm802 = vcmask 195712
    %v803 = vsel %vm802, %v801, %v799
    %v804 = vadd.s32 %v794, 4294967272
    %v805 = vperm.slane %v540, %v804
    %vm806 = vcmask 261312
    %v807 = vsel %vm806, %v805, %v803
    %v808 = vadd.s32 %v794, 4294967264
    %v809 = vperm.slane %v541, %v808
    %vm810 = vcmask 326912
    %v811 = vsel %vm810, %v809, %v807
    %v812 = vadd.s32 %v794, 4294967256
    %v813 = vperm.slane %v542, %v812
    %vm814 = vcmask 392512
    %v815 = vsel %vm814, %v813, %v811
    %v816 = vadd.s32 %v794, 4294967248
    %v817 = vperm.slane %v543, %v816
    %vm818 = vcmask 458112
    %v819 = vsel %vm818, %v817, %v815
    %v820 = vadd.s32 %v794, 4294967240
    %v821 = vperm.slane %v544, %v820
    %vm822 = vcmask 523712
    %v823 = vsel %vm822, %v821, %v819
    %v824 = vadd.s32 %v794, 4294967232
    %v825 = vperm.slane %v545, %v824
    %vm826 = vcmask 589312
    %v827 = vsel %vm826, %v825, %v823
    %v828 = vadd.s32 %v794, 4294967224
    %v829 = vperm.slane %v546, %v828
    %vm830 = vcmask 654912
    %v831 = vsel %vm830, %v829, %v827
    %v832 = vadd.s32 %v794, 4294967216
    %v833 = vperm.slane %v547, %v832
    %vm834 = vcmask 720512
    %v835 = vsel %vm834, %v833, %v831
    %v836 = vadd.s32 %v794, 4294967208
    %v837 = vperm.slane %v548, %v836
    %vm838 = vcmask 786112
    %v839 = vsel %vm838, %v837, %v835
    %v840 = vadd.s32 %v794, 4294967200
    %v841 = vperm.slane %v549, %v840
    %vm842 = vcmask 851712
    %v843 = vsel %vm842, %v841, %v839
    %v844 = vadd.s32 %v794, 4294967192
    %v845 = vperm.slane %v550, %v844
    %vm846 = vcmask 917312
    %v847 = vsel %vm846, %v845, %v843
    %v848 = vadd.s32 %v794, 4294967184
    %v849 = vperm.slane %v551, %v848
    %vm850 = vcmask 982912
    %v851 = vsel %vm850, %v849, %v847
    %v852 = vadd.s32 %v794, 4294967176
    %v853 = vperm.slane %v552, %v852
    %vm854 = vcmask 1048512
    %v855 = vsel %vm854, %v853, %v851
    %v856 = vperm.slane %v553, %v794
    %v857 = vperm.slane %v554, %v796
    %v858 = vsel %vm798, %v857, %v856
    %v859 = vperm.slane %v555, %v800
    %v860 = vsel %vm802, %v859, %v858
    %v861 = vperm.slane %v556, %v804
    %v862 = vsel %vm806, %v861, %v860
    %v863 = vperm.slane %v557, %v808
    %v864 = vsel %vm810, %v863, %v862
    %v865 = vperm.slane %v558, %v812
    %v866 = vsel %vm814, %v865, %v864
    %v867 = vperm.slane %v559, %v816
    %v868 = vsel %vm818, %v867, %v866
    %v869 = vperm.slane %v560, %v820
    %v870 = vsel %vm822, %v869, %v868
    %v871 = vperm.slane %v561, %v824
    %v872 = vsel %vm826, %v871, %v870
    %v873 = vperm.slane %v562, %v828
    %v874 = vsel %vm830, %v873, %v872
    %v875 = vperm.slane %v563, %v832
    %v876 = vsel %vm834, %v875, %v874
    %v877 = vperm.slane %v564, %v836
    %v878 = vsel %vm838, %v877, %v876
    %v879 = vperm.slane %v565, %v840
    %v880 = vsel %vm842, %v879, %v878
    %v881 = vperm.slane %v566, %v844
    %v882 = vsel %vm846, %v881, %v880
    %v883 = vperm.slane %v567, %v848
    %v884 = vsel %vm850, %v883, %v882
    %v885 = vperm.slane %v568, %v852
    %v886 = vsel %vm854, %v885, %v884
    %v887 = vperm.slane %v569, %v794
    %v888 = vperm.slane %v570, %v796
    %v889 = vsel %vm798, %v888, %v887
    %v890 = vperm.slane %v571, %v800
    %v891 = vsel %vm802, %v890, %v889
    %v892 = vperm.slane %v572, %v804
    %v893 = vsel %vm806, %v892, %v891
    %v894 = vperm.slane %v573, %v808
    %v895 = vsel %vm810, %v894, %v893
    %v896 = vperm.slane %v574, %v812
    %v897 = vsel %vm814, %v896, %v895
    %v898 = vperm.slane %v575, %v816
    %v899 = vsel %vm818, %v898, %v897
    %v900 = vperm.slane %v576, %v820
    %v901 = vsel %vm822, %v900, %v899
    %v902 = vperm.slane %v577, %v824
    %v903 = vsel %vm826, %v902, %v901
    %v904 = vperm.slane %v578, %v828
    %v905 = vsel %vm830, %v904, %v903
    %v906 = vperm.slane %v579, %v832
    %v907 = vsel %vm834, %v906, %v905
    %v908 = vperm.slane %v580, %v836
    %v909 = vsel %vm838, %v908, %v907
    %v910 = vperm.slane %v581, %v840
    %v911 = vsel %vm842, %v910, %v909
    %v912 = vperm.slane %v582, %v844
    %v913 = vsel %vm846, %v912, %v911
    %v914 = vperm.slane %v583, %v848
    %v915 = vsel %vm850, %v914, %v913
    %v916 = vperm.slane %v584, %v852
    %v917 = vsel %vm854, %v916, %v915
    %v918 = vperm.slane %v585, %v794
    %v919 = vperm.slane %v586, %v796
    %v920 = vsel %vm798, %v919, %v918
    %v921 = vperm.slane %v587, %v800
    %v922 = vsel %vm802, %v921, %v920
    %v923 = vperm.slane %v588, %v804
    %v924 = vsel %vm806, %v923, %v922
    %v925 = vperm.slane %v589, %v808
    %v926 = vsel %vm810, %v925, %v924
    %v927 = vperm.slane %v590, %v812
    %v928 = vsel %vm814, %v927, %v926
    %v929 = vperm.slane %v591, %v816
    %v930 = vsel %vm818, %v929, %v928
    %v931 = vperm.slane %v592, %v820
    %v932 = vsel %vm822, %v931, %v930
    %v933 = vperm.slane %v593, %v824
    %v934 = vsel %vm826, %v933, %v932
    %v935 = vperm.slane %v594, %v828
    %v936 = vsel %vm830, %v935, %v934
    %v937 = vperm.slane %v595, %v832
    %v938 = vsel %vm834, %v937, %v936
    %v939 = vperm.slane %v596, %v836
    %v940 = vsel %vm838, %v939, %v938
    %v941 = vperm.slane %v597, %v840
    %v942 = vsel %vm842, %v941, %v940
    %v943 = vperm.slane %v598, %v844
    %v944 = vsel %vm846, %v943, %v942
    %v945 = vperm.slane %v599, %v848
    %v946 = vsel %vm850, %v945, %v944
    %v947 = vperm.slane %v600, %v852
    %v948 = vsel %vm854, %v947, %v946
    %v949 = vperm.slane %v601, %v794
    %v950 = vperm.slane %v602, %v796
    %v951 = vsel %vm798, %v950, %v949
    %v952 = vperm.slane %v603, %v800
    %v953 = vsel %vm802, %v952, %v951
    %v954 = vperm.slane %v604, %v804
    %v955 = vsel %vm806, %v954, %v953
    %v956 = vperm.slane %v605, %v808
    %v957 = vsel %vm810, %v956, %v955
    %v958 = vperm.slane %v606, %v812
    %v959 = vsel %vm814, %v958, %v957
    %v960 = vperm.slane %v607, %v816
    %v961 = vsel %vm818, %v960, %v959
    %v962 = vperm.slane %v608, %v820
    %v963 = vsel %vm822, %v962, %v961
    %v964 = vperm.slane %v609, %v824
    %v965 = vsel %vm826, %v964, %v963
    %v966 = vperm.slane %v610, %v828
    %v967 = vsel %vm830, %v966, %v965
    %v968 = vperm.slane %v611, %v832
    %v969 = vsel %vm834, %v968, %v967
    %v970 = vperm.slane %v612, %v836
    %v971 = vsel %vm838, %v970, %v969
    %v972 = vperm.slane %v613, %v840
    %v973 = vsel %vm842, %v972, %v971
    %v974 = vperm.slane %v614, %v844
    %v975 = vsel %vm846, %v974, %v973
    %v976 = vperm.slane %v615, %v848
    %v977 = vsel %vm850, %v976, %v975
    %v978 = vperm.slane %v616, %v852
    %v979 = vsel %vm854, %v978, %v977
    %v980 = vperm.slane %v617, %v794
    %v981 = vperm.slane %v618, %v796
    %v982 = vsel %vm798, %v981, %v980
    %v983 = vperm.slane %v619, %v800
    %v984 = vsel %vm802, %v983, %v982
    %v985 = vperm.slane %v620, %v804
    %v986 = vsel %vm806, %v985, %v984
    %v987 = vperm.slane %v621, %v808
    %v988 = vsel %vm810, %v987, %v986
    %v989 = vperm.slane %v622, %v812
    %v990 = vsel %vm814, %v989, %v988
    %v991 = vperm.slane %v623, %v816
    %v992 = vsel %vm818, %v991, %v990
    %v993 = vperm.slane %v624, %v820
    %v994 = vsel %vm822, %v993, %v992
    %v995 = vperm.slane %v625, %v824
    %v996 = vsel %vm826, %v995, %v994
    %v997 = vperm.slane %v626, %v828
    %v998 = vsel %vm830, %v997, %v996
    %v999 = vperm.slane %v627, %v832
    %v1000 = vsel %vm834, %v999, %v998
    %v1001 = vperm.slane %v628, %v836
    %v1002 = vsel %vm838, %v1001, %v1000
    %v1003 = vperm.slane %v629, %v840
    %v1004 = vsel %vm842, %v1003, %v1002
    %v1005 = vperm.slane %v630, %v844
    %v1006 = vsel %vm846, %v1005, %v1004
    %v1007 = vperm.slane %v631, %v848
    %v1008 = vsel %vm850, %v1007, %v1006
    %v1009 = vperm.slane %v632, %v852
    %v1010 = vsel %vm854, %v1009, %v1008
    %v1011 = vperm.slane %v633, %v794
    %v1012 = vperm.slane %v634, %v796
    %v1013 = vsel %vm798, %v1012, %v1011
    %v1014 = vperm.slane %v635, %v800
    %v1015 = vsel %vm802, %v1014, %v1013
    %v1016 = vperm.slane %v636, %v804
    %v1017 = vsel %vm806, %v1016, %v1015
    %v1018 = vperm.slane %v637, %v808
    %v1019 = vsel %vm810, %v1018, %v1017
    %v1020 = vperm.slane %v638, %v812
    %v1021 = vsel %vm814, %v1020, %v1019
    %v1022 = vperm.slane %v639, %v816
    %v1023 = vsel %vm818, %v1022, %v1021
    %v1024 = vperm.slane %v640, %v820
    %v1025 = vsel %vm822, %v1024, %v1023
    %v1026 = vperm.slane %v641, %v824
    %v1027 = vsel %vm826, %v1026, %v1025
    %v1028 = vperm.slane %v642, %v828
    %v1029 = vsel %vm830, %v1028, %v1027
    %v1030 = vperm.slane %v643, %v832
    %v1031 = vsel %vm834, %v1030, %v1029
    %v1032 = vperm.slane %v644, %v836
    %v1033 = vsel %vm838, %v1032, %v1031
    %v1034 = vperm.slane %v645, %v840
    %v1035 = vsel %vm842, %v1034, %v1033
    %v1036 = vperm.slane %v646, %v844
    %v1037 = vsel %vm846, %v1036, %v1035
    %v1038 = vperm.slane %v647, %v848
    %v1039 = vsel %vm850, %v1038, %v1037
    %v1040 = vperm.slane %v648, %v852
    %v1041 = vsel %vm854, %v1040, %v1039
    %v1042 = vperm.slane %v649, %v794
    %v1043 = vperm.slane %v650, %v796
    %v1044 = vsel %vm798, %v1043, %v1042
    %v1045 = vperm.slane %v651, %v800
    %v1046 = vsel %vm802, %v1045, %v1044
    %v1047 = vperm.slane %v652, %v804
    %v1048 = vsel %vm806, %v1047, %v1046
    %v1049 = vperm.slane %v653, %v808
    %v1050 = vsel %vm810, %v1049, %v1048
    %v1051 = vperm.slane %v654, %v812
    %v1052 = vsel %vm814, %v1051, %v1050
    %v1053 = vperm.slane %v655, %v816
    %v1054 = vsel %vm818, %v1053, %v1052
    %v1055 = vperm.slane %v656, %v820
    %v1056 = vsel %vm822, %v1055, %v1054
    %v1057 = vperm.slane %v657, %v824
    %v1058 = vsel %vm826, %v1057, %v1056
    %v1059 = vperm.slane %v658, %v828
    %v1060 = vsel %vm830, %v1059, %v1058
    %v1061 = vperm.slane %v659, %v832
    %v1062 = vsel %vm834, %v1061, %v1060
    %v1063 = vperm.slane %v660, %v836
    %v1064 = vsel %vm838, %v1063, %v1062
    %v1065 = vperm.slane %v661, %v840
    %v1066 = vsel %vm842, %v1065, %v1064
    %v1067 = vperm.slane %v662, %v844
    %v1068 = vsel %vm846, %v1067, %v1066
    %v1069 = vperm.slane %v663, %v848
    %v1070 = vsel %vm850, %v1069, %v1068
    %v1071 = vperm.slane %v664, %v852
    %v1072 = vsel %vm854, %v1071, %v1070
    %vm1073 = vcmask 1041409
    %v1074 = vsel %vm1073, %v886, %v855
    %vm1075 = vcmask 1042434
    %v1076 = vsel %vm1075, %v917, %v1074
    %vm1077 = vcmask 1043459
    %v1078 = vsel %vm1077, %v948, %v1076
    %vm1079 = vcmask 1044484
    %v1080 = vsel %vm1079, %v979, %v1078
    %vm1081 = vcmask 1045509
    %v1082 = vsel %vm1081, %v1010, %v1080
    %vm1083 = vcmask 1046534
    %v1084 = vsel %vm1083, %v1041, %v1082
    %vm1085 = vcmask 1047559
    %v1086 = vsel %vm1085, %v1072, %v1084
    %1088 = vst [vmem:[#allocation2] sm:$0xff] %v1086
    %v1089 = vld [vmem:[%s1] sm:$0xff]
    %v1090 = vld [vmem:[%s1 + $0x8] sm:$0xff]
    %v1091 = vld [vmem:[%s1 + $0x10] sm:$0xff]
    %v1092 = vld [vmem:[%s1 + $0x18] sm:$0xff]
    %v1093 = vld [vmem:[%s1 + $0x20] sm:$0xff]
    %v1094 = vld [vmem:[%s1 + $0x28] sm:$0xff]
    %v1095 = vld [vmem:[%s1 + $0x30] sm:$0xff]
    %v1096 = vld [vmem:[%s1 + $0x38] sm:$0xff]
    %v1097 = vld [vmem:[%s1 + $0x40] sm:$0xff]
    %v1098 = vld [vmem:[%s1 + $0x48] sm:$0xff]
    %v1099 = vld [vmem:[%s1 + $0x50] sm:$0xff]
    %v1100 = vld [vmem:[%s1 + $0x58] sm:$0xff]
    %v1101 = vld [vmem:[%s1 + $0x60] sm:$0xff]
    %v1102 = vld [vmem:[%s1 + $0x68] sm:$0xff]
    %v1103 = vld [vmem:[%s1 + $0x70] sm:$0xff]
    %v1104 = vld [vmem:[%s1 + $0x78] sm:$0xff]
    %v1105 = vld [vmem:[%s2] sm:$0x1]
    %v1107 = vperm.slane %v1105, 0
    %1109 = vmatpush.msra.mxu0 %v1104
    %1110 = vmatpush.msra.mxu0 %v1103
    %1111 = vmatpush.msra.mxu0 %v1102
    %1112 = vmatpush.msra.mxu0 %v1101
    %1113 = vmatpush.msra.mxu0 %v1100
    %1114 = vmatpush.msra.mxu0 %v1099
    %1115 = vmatpush.msra.mxu0 %v1098
    %1116 = vmatpush.msra.mxu0 %v1097
    %1117 = vmatpush.msra.mxu0 %v1096
    %1118 = vmatpush.msra.mxu0 %v1095
    %1119 = vmatpush.msra.mxu0 %v1094
    %1120 = vmatpush.msra.mxu0 %v1093
    %1121 = vmatpush.msra.mxu0 %v1092
    %1122 = vmatpush.msra.mxu0 %v1091
    %1123 = vmatpush.msra.mxu0 %v1090
    %1124 = vmatpush.msra.mxu0 %v1089
    %1125 = vmatmul.f32.gmra.mxu0 %v1086
    %v1126 = vpop.f32.mrf.mxu0
    %v1127 = vadd.f32 %v1107, %v1126
    %1128 = vdwg.mxu0
    %v1129 = vmax.f32 %v1127, 0.0
    %v1130 = vld [vmem:[%s3] sm:$0xff]
    %v1131 = vld [vmem:[%s3 + $0x8] sm:$0xff]
    %v1132 = vld [vmem:[%s3 + $0x10] sm:$0xff]
    %v1133 = vld [vmem:[%s3 + $0x18] sm:$0xff]
    %v1134 = vld [vmem:[%s3 + $0x20] sm:$0xff]
    %v1135 = vld [vmem:[%s3 + $0x28] sm:$0xff]
    %v1136 = vld [vmem:[%s3 + $0x30] sm:$0xff]
    %v1137 = vld [vmem:[%s3 + $0x38] sm:$0xff]
    %v1138 = vld [vmem:[%s3 + $0x40] sm:$0xff]
    %v1139 = vld [vmem:[%s3 + $0x48] sm:$0xff]
    %v1140 = vld [vmem:[%s3 + $0x50] sm:$0xff]
    %v1141 = vld [vmem:[%s3 + $0x58] sm:$0xff]
    %v1142 = vld [vmem:[%s3 + $0x60] sm:$0xff]
    %v1143 = vld [vmem:[%s3 + $0x68] sm:$0xff]
    %v1144 = vld [vmem:[%s3 + $0x70] sm:$0xff]
    %v1145 = vld [vmem:[%s3 + $0x78] sm:$0xff]
    %v1146 = vld [vmem:[%s4] sm:$0x1]
    %v1148 = vperm.slane %v1146, 0
    %1150 = vmatpush.msra.mxu0 %v1145
    %1151 = vmatpush.msra.mxu0 %v1144
    %1152 = vmatpush.msra.mxu0 %v1143
    %1153 = vmatpush.msra.mxu0 %v1142
    %1154 = vmatpush.msra.mxu0 %v1141
    %1155 = vmatpush.msra.mxu0 %v1140
    %1156 = vmatpush.msra.mxu0 %v1139
    %1157 = vmatpush.msra.mxu0 %v1138
    %1158 = vmatpush.msra.mxu0 %v1137
    %1159 = vmatpush.msra.mxu0 %v1136
    %1160 = vmatpush.msra.mxu0 %v1135
    %1161 = vmatpush.msra.mxu0 %v1134
    %1162 = vmatpush.msra.mxu0 %v1133
    %1163 = vmatpush.msra.mxu0 %v1132
    %1164 = vmatpush.msra.mxu0 %v1131
    %1165 = vmatpush.msra.mxu0 %v1130
    %1166 = vmatmul.f32.gmra.mxu0 %v1129
    %v1167 = vpop.f32.mrf.mxu0
    %v1168 = vadd.f32 %v1148, %v1167
    %1169 = vdwg.mxu0
    %1170 = vst [vmem:[#allocation4] sm:$0xff] %v1168
    // Predicated region
    $region22: #{tpu_custom_call.1} parent=1 // pred_check
      _
    $region23: #{tpu_custom_call.1} parent=1 // pred_check_branch
      %1172 = sbr.rel (0) target = $region25
    $region24: #{tpu_custom_call.1} parent=1 // pred_region
      %1174 = vsyncadd [#allocation3], 0
      %s1176 = sshll.u32 [#allocation2], 4
      %s1177 = int_to_ptr.vmem [resolvable:$true] %s1176
      %s1178 = sshll.u32 %s5, 4
      %s1179 = int_to_ptr.hbm [resolvable:$true] %s1178
      %1181 = dma.vmem_to_hbm [thread:$0]  %s1177, 128, %s1179, [#allocation3]
    $region25: #{tpu_custom_call.1} parent=1 // pred_fallthru
      _
    // Predicated region
    $region26: #{tpu_custom_call.1} parent=1 // pred_check
      _
    $region27: #{tpu_custom_call.1} parent=1 // pred_check_branch
      %1183 = sbr.rel (0) target = $region29
    $region28: #{tpu_custom_call.1} parent=1 // pred_region
      %1185 = vsyncadd [#allocation5], 0
      %s1187 = sshll.u32 [#allocation4], 4
      %s1188 = int_to_ptr.vmem [resolvable:$true] %s1187
      %s1189 = sshll.u32 %s6, 4
      %s1190 = int_to_ptr.hbm [resolvable:$true] %s1189
      %1192 = dma.vmem_to_hbm [thread:$0]  %s1188, 128, %s1190, [#allocation5]
    $region29: #{tpu_custom_call.1} parent=1 // pred_fallthru
      _
    // Predicated region
    $region30: #{tpu_custom_call.1} parent=1 // pred_check
      _
    $region31: #{tpu_custom_call.1} parent=1 // pred_check_branch
      %1194 = sbr.rel (0) target = $region33
    $region32: #{tpu_custom_call.1} parent=1 // pred_region
      %1196 = dma.done [#allocation3], 128
    $region33: #{tpu_custom_call.1} parent=1 // pred_fallthru
      _
    // Predicated region
    $region34: #{tpu_custom_call.1} parent=1 // pred_check
      _
    $region35: #{tpu_custom_call.1} parent=1 // pred_check_branch
      %1198 = sbr.rel (0) target = $region37
    $region36: #{tpu_custom_call.1} parent=1 // pred_region
      %1200 = dma.done [#allocation5], 128
    $region37: #{tpu_custom_call.1} parent=1 // pred_fallthru
      _
    %1201 = vsyncpa [#allocation3], 1
    %1202 = vsyncpa [#allocation5], 1

</llo_original>
